<compile_context>
chip_gen: v7x
topology: tpu7x:2x2x1
jax: 0.10.0
libtpu: 0.0.40
codegen_flags: <defaults>
</compile_context>

<pallas_src>
import jax
import jax.numpy as jnp
from jax.experimental import pallas as pl
from jax.experimental.pallas import tpu as pltpu


_LANES = 128
_TARGET_BLOCK_BYTES = 4 * 1024 * 1024       # per input block (Pallas double-buffers it)
_PS_TARGET_BLOCK_BYTES = 2 * 1024 * 1024    # per-sample path (adds a same-sized f32 acc)
_MAX_TILE_B = 512                           # per-sample: max batch rows per block
_VMEM_LIMIT_BYTES = 32 * 1024 * 1024        # raises v5e's 16 MiB default, safe on v7x

# Pad values whose per-element loss term is exactly 0 -> padded tails need no mask.
_NEUTRAL_PAD = {
    'identity': 0.0,        # -x * w                         -> 0
    'hinge_real': 1.0,      # relu(1 - x)                    -> 0
    'hinge_fake': -1.0,     # relu(1 + x)                    -> 0
    'bce_ones': 1.0e4,      # max(-x, 0) + log1p(exp(-|x|))  -> 0 (exp underflows)
    'bce_zeros': -1.0e4,    # max(x, 0)  + log1p(exp(-|x|))  -> 0
}


def _cdiv(a, b):
    return -(-a // b)


def _round_up(a, m):
    return _cdiv(a, m) * m


def _num_tensorcores():
    """Best-effort TensorCore count; 1 on v5e/v6e, 2 on v7x megacore."""
    try:
        d = jax.devices()[0]
        for attr in ('num_cores', 'core_count'):
            v = getattr(d, attr, None)
            if isinstance(v, int) and v >= 1:
                return v
        dk = (getattr(d, 'device_kind', '') or '').lower()
        if 'v7' in dk or '7x' in dk:
            return 2
    except Exception:
        pass
    return 1


def _bf16_eup_ok():
    """bf16 EUP (exp/log1p) only pays off on v6e/v7x; keep f32 elsewhere."""
    try:
        dk = (jax.devices()[0].device_kind or '').lower()
    except Exception:
        return False
    return ('v6' in dk) or ('v7' in dk) or ('7x' in dk)


def _choose_tile(size, max_tile, align, min_tile):
    """Tile a 1-D extent. Returns (tile, padded_size).

    Preference order: (a) a single full-extent tile (layout-legal for any size,
    zero padding), (b) an exact divisor that is a multiple of `align` (zero
    padding / zero-copy), (c) pad `size` up to a multiple of max_tile (rare
    fallback; the pad uses a loss-neutral value so no in-kernel mask is needed).
    """
    if size <= max_tile:
        return size, size
    max_tile = max(align, (max_tile // align) * align)
    min_tile = max(align, min(min_tile, max_tile))
    t = max_tile
    while t >= min_tile:
        if size % t == 0:
            return t, size
        t -= align
    return max_tile, _round_up(size, max_tile)


def _make_elementwise(kind, in_dtype):
    """Per-element loss term, returned in f32."""
    use_bf16_eup = (jnp.dtype(in_dtype) == jnp.dtype(jnp.bfloat16)) and _bf16_eup_ok()

    def f(x):
        xf = x.astype(jnp.float32)
        if kind == 'identity':                  # hinge generator: -mean(x) * w
            return xf
        if kind == 'hinge_real':                # relu(1 - x)
            return jnp.maximum(1.0 - xf, 0.0)
        if kind == 'hinge_fake':                # relu(1 + x)
            return jnp.maximum(1.0 + xf, 0.0)
        # Stable BCE-with-logits softplus term: log1p(exp(-|x|)).
        if use_bf16_eup:
            sp = jnp.log1p(jnp.exp(-jnp.abs(x))).astype(jnp.float32)   # bf16 EUP
        else:
            sp = jnp.log1p(jnp.exp(-jnp.abs(xf)))
        if kind == 'bce_ones':                  # target = 1
            return jnp.maximum(-xf, 0.0) + sp
        if kind == 'bce_zeros':                 # target = 0
            return jnp.maximum(xf, 0.0) + sp
        raise NotImplementedError(kind)

    return f


# ----------------------------- global (scalar) reduction -----------------------------

def _make_global_kernel(elemwise, scale, tile_rows, tiles_per_split, group):
    cols = _LANES

    def kernel(x_ref, o_ref, acc_ref):
        k = pl.program_id(1)                    # reduction ("arbitrary") axis

        @pl.when(k == 0)
        def _init():
            acc_ref[...] = jnp.zeros_like(acc_ref)

        vals = elemwise(x_ref[...])             # (tile_rows, 128) f32, no mask
        if group == 8:
            # Add rows in 8-row vreg groups (pure vadds); defer XLU reduces.
            acc_ref[...] += jnp.sum(vals.reshape(tile_rows // 8, 8, cols), axis=0)
        else:
            # Small full-extent tile with odd row count (rare).
            acc_ref[...] += jnp.sum(vals, axis=0, keepdims=True)

        @pl.when(k == pl.num_programs(1) - 1)
        def _finalize():
            col = jnp.sum(acc_ref[...], axis=0, keepdims=True)     # (1, 128)
            total = jnp.sum(col, axis=1, keepdims=True)            # (1, 1)
            o_ref[...] = (total * scale).reshape(1, 1, 1)

    return kernel


def _global_reduce_loss(x, kind, scale):
    """sum(elem(kind, x)) * scale over all elements, as one tiled Pallas reduction."""
    n = int(x.size)
    itemsize = jnp.dtype(x.dtype).itemsize
    flat = x.reshape(-1)                        # free; no wrapper-side cast

    rows = _cdiv(n, _LANES)
    max_rows = max(8, ((_TARGET_BLOCK_BYTES // (_LANES * itemsize)) // 8) * 8)
    tile_rows, rows_p = _choose_tile(rows, max_rows, 8, max(8, max_rows // 4))

    n_p = rows_p * _LANES
    if n_p != n:                                # rare fallback: loss-neutral pad
        flat = jnp.pad(flat, (0, n_p - n), constant_values=_NEUTRAL_PAD[kind])
    x2d = flat.reshape(rows_p, _LANES)

    n_tiles = rows_p // tile_rows
    cores = _num_tensorcores()
    n_split = cores if (cores > 1 and n_tiles % cores == 0) else 1
    tiles_per_split = n_tiles // n_split
    group = 8 if tile_rows % 8 == 0 else 1

    kernel = _make_global_kernel(_make_elementwise(kind, x.dtype), float(scale),
                                 tile_rows, tiles_per_split, group)
    partial = pl.pallas_call(
        kernel,
        out_shape=jax.ShapeDtypeStruct((n_split, 1, 1), jnp.float32),
        grid_spec=pltpu.PrefetchScalarGridSpec(
            num_scalar_prefetch=0,
            grid=(n_split, tiles_per_split),
            in_specs=[pl.BlockSpec((tile_rows, _LANES),
                                   lambda s, k: (s * tiles_per_split + k, 0))],
            out_specs=pl.BlockSpec((1, 1, 1), lambda s, k: (s, 0, 0)),
            scratch_shapes=[pltpu.VMEM((group, _LANES), jnp.float32)],
        ),
        compiler_params=pltpu.CompilerParams(
            dimension_semantics=("parallel", "arbitrary"),
            vmem_limit_bytes=_VMEM_LIMIT_BYTES),
    )(x2d)
    return jnp.sum(partial)                     # add per-core partial (scaled) sums


# ----------------------------- per-sample reduction -----------------------------

def _make_per_sample_kernel(elemwise, scale):
    def kernel(x_ref, o_ref, acc_ref):
        j = pl.program_id(1)                    # feat-tile ("arbitrary") axis

        @pl.when(j == 0)
        def _init():
            acc_ref[...] = jnp.zeros_like(acc_ref)

        # Accumulate full-width; the cross-lane reduce is deferred to finalize.
        acc_ref[...] += elemwise(x_ref[...])

        @pl.when(j == pl.num_programs(1) - 1)
        def _finalize():
            o_ref[...] = jnp.sum(acc_ref[...], axis=1, keepdims=True) * scale

    return kernel


def _per_sample_reduce_loss(x, kind, scale):
    """Per-sample sum(elem(kind, x[b])) * scale; samples packed on sublanes."""
    b = int(x.shape[0])
    feat = int(x.size) // b
    itemsize = jnp.dtype(x.dtype).itemsize
    x2 = x.reshape(b, feat)                     # free; batch on sublanes, feat on lanes

    tile_b = b                                  # full-extent batch block unless huge
    if b > _MAX_TILE_B:
        t = _MAX_TILE_B
        while t >= 8 and b % t != 0:
            t -= 8
        if t >= 8:
            tile_b = t                          # multiple-of-8 divisor of b

    sub = max(tile_b, 8)
    max_f = max(_LANES,
                ((_PS_TARGET_BLOCK_BYTES // (sub * itemsize)) // _LANES) * _LANES)
    tile_f, feat_p = _choose_tile(feat, max_f, _LANES, max(_LANES, max_f // 4))
    if feat_p != feat:                          # rare fallback: loss-neutral pad
        x2 = jnp.pad(x2, ((0, 0), (0, feat_p - feat)),
                     constant_values=_NEUTRAL_PAD[kind])

    n_b = b // tile_b
    n_f = feat_p // tile_f

    kernel = _make_per_sample_kernel(_make_elementwise(kind, x.dtype), float(scale))
    out = pl.pallas_call(
        kernel,
        out_shape=jax.ShapeDtypeStruct((b, 1), jnp.float32),
        grid_spec=pltpu.PrefetchScalarGridSpec(
            num_scalar_prefetch=0,
            grid=(n_b, n_f),
            in_specs=[pl.BlockSpec((tile_b, tile_f), lambda i, j: (i, j))],
            out_specs=pl.BlockSpec((tile_b, 1), lambda i, j: (i, 0)),
            scratch_shapes=[pltpu.VMEM((tile_b, tile_f), jnp.float32)],
        ),
        compiler_params=pltpu.CompilerParams(
            dimension_semantics=("parallel", "arbitrary"),
            vmem_limit_bytes=_VMEM_LIMIT_BYTES),
    )(x2)
    return out.reshape(b)


# ----------------------------- module wrapper -----------------------------

class GANLossPallas:
    """Pallas re-implementation of GANLoss.forward ('hinge', 'non_saturating')."""

    def __init__(self, gan_type='hinge', real_label_val=1.0, fake_label_val=0.0,
                 loss_weight=1.0):
        if gan_type not in ('hinge', 'non_saturating'):
            raise NotImplementedError(f'GAN type {gan_type} is not implemented.')
        self.gan_type = gan_type
        self.real_label_val = real_label_val    # unused by these two paths
        self.fake_label_val = fake_label_val    # unused by these two paths
        self.loss_weight = loss_weight

    def __call__(self, input, input_logit, target_is_real, is_disc=False, mask=None):
        # `mask` is accepted but unused — identical to the reference forward().
        if self.gan_type == 'hinge':
            x = input
            n = int(x.size)
            if is_disc:
                kind = 'hinge_real' if target_is_real else 'hinge_fake'
                return _global_reduce_loss(x, kind, 1.0 / n)
            # generator: (-input.mean()) * loss_weight
            return _global_reduce_loss(x, 'identity', -float(self.loss_weight) / n)

        # non_saturating
        x = input_logit
        if is_disc:
            kind = 'bce_ones' if target_is_real else 'bce_zeros'
            return _global_reduce_loss(x, kind, 1.0 / int(x.size))
        # generator: per-sample mean of BCE vs ones, then * loss_weight
        feat = int(x.size) // int(x.shape[0])
        return _per_sample_reduce_loss(x, 'bce_ones',
                                       float(self.loss_weight) / feat)


# ----------------------------- reference (pure jnp) -----------------------------

def _ref_loss(gan_type, x, x_logit, target_is_real, is_disc, loss_weight):
    if gan_type == 'hinge':
        xi = x.astype(jnp.float32)
        if is_disc:
            xi = -xi if target_is_real else xi
            return jnp.mean(jnp.maximum(1.0 + xi, 0.0))
        return -jnp.mean(xi) * loss_weight
    z = x_logit.astype(jnp.float32)
    if is_disc:
        t = 1.0 if target_is_real else 0.0
        bce = jnp.maximum(z, 0.0) - z * t + jnp.log1p(jnp.exp(-jnp.abs(z)))
        return jnp.mean(bce)
    bce1 = jnp.maximum(z, 0.0) - z + jnp.log1p(jnp.exp(-jnp.abs(z)))
    return jnp.mean(bce1.reshape(z.shape[0], -1), axis=1) * loss_weight


if __name__ == "__main__":
    key = jax.random.PRNGKey(0)
    k1, k2, k3, k4 = jax.random.split(key, 4)
    # Discriminator prediction maps, NCHW: batch=2, channels=4, spatial=16x16
    # (128-aligned, zero-copy path) plus an odd shape exercising the pad fallback.
    x = jax.random.normal(k1, (2, 4, 16, 16), dtype=jnp.float32)
    x_logit = jax.random.normal(k2, (2, 4, 16, 16), dtype=jnp.float32)
    y = jax.random.normal(k3, (2, 3, 5, 7), dtype=jnp.float32)
    y_logit = jax.random.normal(k4, (2, 3, 5, 7), dtype=jnp.float32)

    hinge = GANLossPallas('hinge', loss_weight=0.5)
    nonsat = GANLossPallas('non_saturating', loss_weight=0.5)

    cases = [
        ('hinge', hinge, True, True),              # relu(1 - x).mean()
        ('hinge', hinge, False, True),             # relu(1 + x).mean()
        ('hinge', hinge, True, False),             # -x.mean() * w
        ('non_saturating', nonsat, True, True),    # BCE vs ones, mean
        ('non_saturating', nonsat, False, True),   # BCE vs zeros, mean
        ('non_saturating', nonsat, True, False),   # per-sample BCE mean * w
    ]

    for (a, a_logit) in ((x, x_logit), (y, y_logit)):
        for gtype, mod, tgt, disc in cases:
            got = mod(a, a_logit, target_is_real=tgt, is_disc=disc)
            want = _ref_loss(gtype, a, a_logit, tgt, disc, 0.5)
            got = jax.block_until_ready(got)
            want = jax.block_until_ready(want)
            assert jnp.allclose(got, want, rtol=1e-4, atol=1e-4), \
                (f"mismatch for shape={a.shape} {gtype} target_is_real={tgt} "
                 f"is_disc={disc}: {got} vs {want}")

    print("KERNEL_OK")
</pallas_src>

<mosaic_0001>
module attributes {stable_mosaic.version = 11 : i64} {
  func.func @kernel(%arg0: i32, %arg1: i32, %arg2: memref<16x128xf32, #tpu.memory_space<vmem>>, %arg3: memref<1x1x1xf32, #tpu.memory_space<vmem>>, %arg4: memref<8x128xf32, #tpu.memory_space<vmem>>) attributes {dimension_semantics = [#tpu.dimension_semantics<parallel>, #tpu.dimension_semantics<arbitrary>], iteration_bounds = array<i64: 1, 1>, scalar_prefetch = 0 : i64, scratch_operands = 1 : i64, tpu.core_type = #tpu.core_type<tc>, window_params = [{transform_indices = @transform_0, window_bounds = array<i64: 16, 128>}, {transform_indices = @transform_1, window_bounds = array<i64: 1, 1, 1>}]} {
    %c0_i32 = arith.constant 0 : i32
    %0 = arith.cmpi eq, %arg1, %c0_i32 : i32
    %1 = arith.extui %0 : i1 to i32
    %c0_i32_0 = arith.constant 0 : i32
    %2 = arith.cmpi ne, %1, %c0_i32_0 : i32
    scf.if %2 {
      %cst_10 = arith.constant 0.000000e+00 : f32
      %16 = vector.broadcast %cst_10 : f32 to vector<8x128xf32>
      %c0_11 = arith.constant 0 : index
      %c0_12 = arith.constant 0 : index
      %17 = vector.load %arg4[%c0_11, %c0_12] : memref<8x128xf32, #tpu.memory_space<vmem>>, vector<8x128xf32>
      tpu.vector_store %arg4[%c0_11, %c0_12], %16 {strides = array<i32>} : memref<8x128xf32, #tpu.memory_space<vmem>>, vector<8x128xf32>,
    } else {
    }
    %c0 = arith.constant 0 : index
    %c0_1 = arith.constant 0 : index
    %3 = vector.load %arg2[%c0, %c0_1] : memref<16x128xf32, #tpu.memory_space<vmem>>, vector<16x128xf32>
    %cst = arith.constant 1.000000e+00 : f32
    %4 = vector.broadcast %cst : f32 to vector<16x128xf32>
    %5 = arith.subf %4, %3 : vector<16x128xf32>
    %cst_2 = arith.constant 0.000000e+00 : f32
    %6 = vector.broadcast %cst_2 : f32 to vector<16x128xf32>
    %7 = arith.maximumf %5, %6 : vector<16x128xf32>
    %c0_3 = arith.constant 0 : index
    %c0_4 = arith.constant 0 : index
    %8 = vector.load %arg4[%c0_3, %c0_4] : memref<8x128xf32, #tpu.memory_space<vmem>>, vector<8x128xf32>
    %9 = vector.shape_cast %7 : vector<16x128xf32> to vector<2x8x128xf32>
    %cst_5 = arith.constant dense<0.000000e+00> : vector<8x128xf32>
    %10 = vector.multi_reduction <add>, %9, %cst_5 [0] : vector<2x8x128xf32> to vector<8x128xf32>
    %11 = arith.addf %8, %10 : vector<8x128xf32>
    %c0_6 = arith.constant 0 : index
    %c0_7 = arith.constant 0 : index
    %12 = vector.load %arg4[%c0_6, %c0_7] : memref<8x128xf32, #tpu.memory_space<vmem>>, vector<8x128xf32>
    tpu.vector_store %arg4[%c0_6, %c0_7], %11 {strides = array<i32>} : memref<8x128xf32, #tpu.memory_space<vmem>>, vector<8x128xf32>,
    %c0_i32_8 = arith.constant 0 : i32
    %13 = arith.cmpi eq, %arg1, %c0_i32_8 : i32
    %14 = arith.extui %13 : i1 to i32
    %c0_i32_9 = arith.constant 0 : i32
    %15 = arith.cmpi ne, %14, %c0_i32_9 : i32
    scf.if %15 {
      %c0_10 = arith.constant 0 : index
      %c0_11 = arith.constant 0 : index
      %16 = vector.load %arg4[%c0_10, %c0_11] : memref<8x128xf32, #tpu.memory_space<vmem>>, vector<8x128xf32>
      %cst_12 = arith.constant dense<0.000000e+00> : vector<128xf32>
      %17 = vector.multi_reduction <add>, %16, %cst_12 [0] : vector<8x128xf32> to vector<128xf32>
      %18 = vector.shape_cast %17 : vector<128xf32> to vector<1x128xf32>
      %cst_13 = arith.constant dense<0.000000e+00> : vector<1xf32>
      %19 = vector.multi_reduction <add>, %18, %cst_13 [1] : vector<1x128xf32> to vector<1xf32>
      %20 = vector.shape_cast %19 : vector<1xf32> to vector<1x1xf32>
      %cst_14 = arith.constant 4.8828125E-4 : f32
      %21 = vector.broadcast %cst_14 : f32 to vector<1x1xf32>
      %22 = arith.mulf %20, %21 : vector<1x1xf32>
      %23 = vector.shape_cast %22 : vector<1x1xf32> to vector<1x1x1xf32>
      %c0_15 = arith.constant 0 : index
      %c0_16 = arith.constant 0 : index
      %c0_17 = arith.constant 0 : index
      %24 = vector.load %arg3[%c0_15, %c0_16, %c0_17] : memref<1x1x1xf32, #tpu.memory_space<vmem>>, vector<1x1x1xf32>
      tpu.vector_store %arg3[%c0_15, %c0_16, %c0_17], %23 {strides = array<i32>} : memref<1x1x1xf32, #tpu.memory_space<vmem>>, vector<1x1x1xf32>,
    } else {
    }
    return
  }
  func.func @transform_0(%arg0: i32, %arg1: i32) -> (i32, i32) {
    %c1_i32 = arith.constant 1 : i32
    %0 = arith.muli %arg0, %c1_i32 : i32
    %1 = arith.addi %0, %arg1 : i32
    %c0_i32 = arith.constant 0 : i32
    %c0_i32_0 = arith.constant 0 : i32
    return %1, %c0_i32 : i32, i32
  }
  func.func @transform_1(%arg0: i32, %arg1: i32) -> (i32, i32, i32) {
    %c0_i32 = arith.constant 0 : i32
    %c0_i32_0 = arith.constant 0 : i32
    %c0_i32_1 = arith.constant 0 : i32
    return %arg0, %c0_i32, %c0_i32_0 : i32, i32, i32
  }
}

</mosaic_0001>

<llo_original>
// kernel: tpu_custom_call.1
$region0: #{tpu_custom_call.1}
  #allocation0 [shape = 'u32[]', space=smem, size = 0x4, offset = 0x4, fixed_abs, tag = 'smem constant byte address 0x4 - core index']
  #allocation1 [shape = 'u32[144,128]{1,0:T(1,128)}', space=vmem, size = 0x12000, scoped, tag = 'internal scratch']
  #allocation2 [shape = 'f32[8,128]{1,0:T(8,128)}', space=vmem, size = 0x1000, scoped, tag = 'scratch operand']
  %s0 = inlined_call_operand.hbm [shape: f32[16,128], index: 0, kind: input, shape index: {}]
  %s1 = inlined_call_operand.hbm [shape: f32[1,1,1], index: 1, kind: output, shape index: {}]
  %s2 = sld [smem:[#allocation0]]
  $region26: #{tpu_custom_call.1} parent=0
    _
  %s4 = ssub.s32 1, %s2
  %s5 = scalar_select 0, %s4, %s2
  $region1: #{tpu_custom_call.1} parent=0
    #allocation3 [shape = 'u8[8192]{0}', space=vmem, size = 0x2000, scoped, tag = 'input window, operand 0, single buffered']
    #allocation4 [shape = 's32[1]{0}', space=sflag, size = 0x4, scoped, tag = 'scoped memory for tpu_custom_call.1']
    #allocation5 [shape = 's32[1]{0}', space=sflag, size = 0x4, scoped, tag = 'scoped memory for tpu_custom_call.1']
    #allocation6 [shape = 'u8[512]{0}', space=vmem, size = 0x400, scoped, tag = 'output window, operand 0, single buffered']
    %6 = vsyncpa [#allocation4], 0
    %7 = vsyncpa [#allocation5], 0
    // Predicated region
    $region2: #{tpu_custom_call.1} parent=1 // pred_check
      _
    $region3: #{tpu_custom_call.1} parent=1 // pred_check_branch
      %9 = sbr.rel (0) target = $region5
    $region4: #{tpu_custom_call.1} parent=1 // pred_region
      %s10 = sadd.s32 0, 0
      %s11 = smul.u32 2, %s10
      %s13 = ssub.s32 256, 256
      %14 = vsyncadd [#allocation4], %s13
      %s15 = smul.addr %s11, 128
      %s16 = scalar_lea.hbm %s0, %s15
      %s17 = sshll.u32 [#allocation3], 4
      %s18 = int_to_ptr.vmem [resolvable:$true] %s17
      %23 = dma.hbm_to_vmem [thread:$0]  %s16, 256, %s18, [#allocation4], 128, 128, 8
    $region5: #{tpu_custom_call.1} parent=1 // pred_fallthru
      _
    // Predicated region
    $region6: #{tpu_custom_call.1} parent=1 // pred_check
      _
    $region7: #{tpu_custom_call.1} parent=1 // pred_check_branch
      %25 = sbr.rel (0) target = $region9
    $region8: #{tpu_custom_call.1} parent=1 // pred_region
      %26 = dma.done [#allocation4], 256
    $region9: #{tpu_custom_call.1} parent=1 // pred_fallthru
      _
    %s27 = sadd.s32 0, 0
    %s28 = smul.u32 2, %s27
    %p29 = scmp.eq.s32.totalorder 0, 0
    // Predicated region
    $region10: #{tpu_custom_call.1} parent=1 // pred_check
      %p30 = pneg %p29
    $region11: #{tpu_custom_call.1} parent=1 // pred_check_branch
      %32 = sbr.rel (%p30) target = $region13
    $region12: #{tpu_custom_call.1} parent=1 // pred_region
      %33 = vst [vmem:[#allocation2] sm:$0xff] 0.0
    $region13: #{tpu_custom_call.1} parent=1 // pred_fallthru
      _
    %v34 = vld [vmem:[#allocation3] sm:$0xff]
    %v35 = vld [vmem:[#allocation3 + $0x8] sm:$0xff]
    %v36 = vsub.f32 1.0, %v34
    %v37 = vsub.f32 1.0, %v35
    %v38 = vmax.f32 %v36, 0.0
    %v39 = vmax.f32 %v37, 0.0
    %v40 = vld [vmem:[#allocation2] sm:$0xff]
    %v41 = vadd.f32 %v38, %v39
    %v42 = vadd.f32 %v40, %v41
    %43 = vst [vmem:[#allocation2] sm:$0xff] %v42
    // Predicated region
    $region14: #{tpu_custom_call.1} parent=1 // pred_check
      %p44 = pneg %p29
    $region15: #{tpu_custom_call.1} parent=1 // pred_check_branch
      %46 = sbr.rel (%p44) target = $region17
    $region16: #{tpu_custom_call.1} parent=1 // pred_region
      %v47 = vld [vmem:[#allocation2] sm:$0xff]
      %v48 = vrot.slane %v47, 4
      %v49 = vadd.f32 %v47, %v48
      %v50 = vrot.slane %v49, 2
      %v51 = vadd.f32 %v49, %v50
      %v52 = vrot.slane %v51, 1
      %v53 = vadd.f32 %v51, %v52
      %54 = vadd.xlane.f32.xlu0 %v53
      %v55 = vpop.xlane.xlu0 %54
      %v56 = vmul.f32 %v55, 0.00048828125
      %vm57 = vcmask 0
      %58 = vst.msk [vmem:[#allocation6] sm:$0x1] %vm57, %v56
    $region17: #{tpu_custom_call.1} parent=1 // pred_fallthru
      _
    // Predicated region
    $region18: #{tpu_custom_call.1} parent=1 // pred_check
      _
    $region19: #{tpu_custom_call.1} parent=1 // pred_check_branch
      %60 = sbr.rel (0) target = $region21
    $region20: #{tpu_custom_call.1} parent=1 // pred_region
      %s62 = ssub.s32 16, 16
      %63 = vsyncadd [#allocation5], %s62
      %s65 = sshll.u32 [#allocation6], 4
      %s66 = int_to_ptr.vmem [resolvable:$true] %s65
      %68 = dma.vmem_to_hbm [thread:$0]  %s66, 16, %s1, [#allocation5]
    $region21: #{tpu_custom_call.1} parent=1 // pred_fallthru
      _
    // Predicated region
    $region22: #{tpu_custom_call.1} parent=1 // pred_check
      _
    $region23: #{tpu_custom_call.1} parent=1 // pred_check_branch
      %70 = sbr.rel (0) target = $region25
    $region24: #{tpu_custom_call.1} parent=1 // pred_region
      %71 = dma.done [#allocation5], 16
    $region25: #{tpu_custom_call.1} parent=1 // pred_fallthru
      _
    %72 = vsyncpa [#allocation4], 1
    %73 = vsyncpa [#allocation5], 1

</llo_original>
